<compile_context>
chip_gen: v5e
topology: v5e:2x2
jax: 0.10.0
libtpu: 0.0.40
codegen_flags: <defaults>
</compile_context>

<pallas_src>
import math

import jax
import jax.numpy as jnp
import numpy as np
from jax.experimental import pallas as pl
from jax.experimental.pallas import tpu as pltpu

K = 7                    # conv kernel size from AttentionGate.__init__
PAD = (K - 1) // 2       # padding = 3


def _make_kernel(C, HW):
    inv_c = 1.0 / float(C)

    def kernel(x_ref, cm_ref, b_ref, o_ref):
        # x_ref  : (BN, C, HW)   VMEM  lane-dense input block
        # cm_ref : (2, HW, HW)   VMEM  conv-as-matmul matrices (weights*BN-scale + padding folded in)
        # b_ref  : (1,)          SMEM  folded BN bias
        # o_ref  : (BN, C, HW)   VMEM  lane-dense output block
        xv = x_ref[...]                                   # single load; reused by ZPool and gate

        # --- ZPool: max / mean over channels (widen only inside the reductions) ---
        x_max = jnp.max(xv, axis=1).astype(jnp.float32)                # (BN, HW)
        x_mean = jnp.sum(xv, axis=1, dtype=jnp.float32) * inv_c        # (BN, HW)

        # --- Conv2d(2,1,7,pad=3,bias=False) + eval-BN scale as two MXU matmuls ---
        y = jnp.dot(x_max, cm_ref[0], preferred_element_type=jnp.float32)
        y = y + jnp.dot(x_mean, cm_ref[1], preferred_element_type=jnp.float32)
        y = y + b_ref[0]

        # --- sigmoid (tanh form -> EUP, no VALU divide) + gate ---
        scale = 0.5 * jnp.tanh(0.5 * y) + 0.5                          # (BN, HW)
        o_ref[...] = (xv * scale.astype(xv.dtype)[:, None, :]).astype(o_ref.dtype)

    return kernel


def _build_conv_matrices(w_folded_flat, H, W):
    """(2, HW, HW) f32: m[c, q, p] = folded weight connecting input pixel q of pooled
    plane c to output pixel p under the zero-padded 7x7 'same' convolution."""
    HW = H * W
    hh = np.arange(HW) // W
    ww = np.arange(HW) % W
    chans, q_idx, p_idx, taps = [], [], [], []
    for c in range(2):
        for kh in range(K):
            dh = kh - PAD
            for kw in range(K):
                dw = kw - PAD
                valid = (hh + dh >= 0) & (hh + dh < H) & (ww + dw >= 0) & (ww + dw < W)
                p = np.nonzero(valid)[0]
                q = (hh[p] + dh) * W + (ww[p] + dw)
                chans.append(np.full(p.shape, c, np.int32))
                q_idx.append(q.astype(np.int32))
                p_idx.append(p.astype(np.int32))
                taps.append(np.full(p.shape, c * K * K + kh * K + kw, np.int32))
    chans = jnp.asarray(np.concatenate(chans))
    q_idx = jnp.asarray(np.concatenate(q_idx))
    p_idx = jnp.asarray(np.concatenate(p_idx))
    taps = jnp.asarray(np.concatenate(taps))
    mat = jnp.zeros((2, HW, HW), jnp.float32)
    return mat.at[chans, q_idx, p_idx].add(w_folded_flat[taps])


def _vmem_budget_bytes():
    """Generation-aware VMEM budget for the double-buffered in/out blocks."""
    cap = 64 * 1024 * 1024            # conservative fallback = v7x physical VMEM
    try:
        info = pltpu.get_tpu_info()
        cap = int(getattr(info, "vmem_capacity_bytes", cap))
    except Exception:
        pass
    # Leave room for the resident conv matrices, the other pipeline stage and
    # compiler temporaries; v5e/v6e (128 MiB) get ~40 MiB, v7x (64 MiB) ~21 MiB.
    return max(8 * 1024 * 1024, min(cap // 3, 40 * 1024 * 1024)), cap


def _pick_bn(N, per_batch_bytes, block_budget):
    fits = [d for d in range(1, N + 1) if N % d == 0 and d * per_batch_bytes <= block_budget]
    if not fits:
        # TODO(synk): tile H with a PAD-row halo if a single (C, H*W) slab overflows VMEM.
        return 1
    multi_step = [d for d in fits if N // d >= 2]     # keep grid >= 2 for v7x megacore
    return max(multi_step) if multi_step else max(fits)


def attention_gate(x, conv_w, bn_gamma, bn_beta, bn_mean, bn_var, eps=1e-5):
    """x: (N, C, H, W). conv_w: (1, 2, K, K). BN params are scalars (eval mode)."""
    N, C, H, W = x.shape
    HW = H * W

    # Fold eval-mode BatchNorm (single output channel) into conv weights / bias.
    # TODO(synk): training-mode BN (batch statistics over N,H,W) not implemented.
    bn_scale = bn_gamma / jnp.sqrt(bn_var + eps)
    bn_bias = bn_beta - bn_mean * bn_scale
    w_folded = (conv_w.reshape(2 * K * K) * bn_scale).astype(jnp.float32)
    b_folded = jnp.reshape(bn_bias, (1,)).astype(jnp.float32)

    conv_mat = _build_conv_matrices(w_folded, H, W)                 # (2, HW, HW) f32
    convmat_bytes = 2 * HW * HW * 4

    itemsize = x.dtype.itemsize
    c_pad = ((C + 7) // 8) * 8                                      # sublane padding in VMEM
    per_batch_bytes = 4 * c_pad * HW * itemsize                     # 2 in + 2 out buffers
    budget, cap = _vmem_budget_bytes()
    block_budget = max(per_batch_bytes, budget - 2 * convmat_bytes)
    BN = _pick_bn(N, per_batch_bytes, block_budget)

    needed = BN * per_batch_bytes + 2 * convmat_bytes + (1 << 20)
    vmem_limit = None
    if needed > 16 * 1024 * 1024:                                   # v5e's scoped default
        vmem_limit = int(min(needed + (4 << 20), (cap * 3) // 4))

    x_flat = x.reshape(N, C, HW)
    grid = (N // BN,)

    cost = pl.CostEstimate(
        flops=int(N * (2 * C * HW + 2 * 2 * HW * HW + (C + 5) * HW)),
        transcendentals=int(N * HW),
        bytes_accessed=int(2 * N * C * HW * itemsize + convmat_bytes),
    )

    out = pl.pallas_call(
        _make_kernel(C, HW),
        out_shape=jax.ShapeDtypeStruct((N, C, HW), x.dtype),
        grid=grid,
        in_specs=[
            pl.BlockSpec((BN, C, HW), lambda n: (n, 0, 0)),
            pl.BlockSpec((2, HW, HW), lambda n: (0, 0, 0)),   # resident conv matrices
            pl.BlockSpec(memory_space=pltpu.MemorySpace.SMEM),
        ],
        out_specs=pl.BlockSpec((BN, C, HW), lambda n: (n, 0, 0)),
        compiler_params=pltpu.CompilerParams(
            dimension_semantics=("parallel",),
            vmem_limit_bytes=vmem_limit,
        ),
        cost_estimate=cost,
    )(x_flat, conv_mat, b_folded)

    return out.reshape(N, C, H, W)


def attention_gate_ref(x, conv_w, bn_gamma, bn_beta, bn_mean, bn_var, eps=1e-5):
    """Pure-JAX reference of the PyTorch forward (eval-mode BN)."""
    x_max = jnp.max(x, axis=1, keepdims=True)
    x_mean = jnp.mean(x, axis=1, keepdims=True)
    zp = jnp.concatenate([x_max, x_mean], axis=1)                    # (N, 2, H, W)
    conv = jax.lax.conv_general_dilated(
        zp, conv_w, window_strides=(1, 1), padding=[(PAD, PAD), (PAD, PAD)],
        dimension_numbers=("NCHW", "OIHW", "NCHW"))
    y = (conv - bn_mean) / jnp.sqrt(bn_var + eps) * bn_gamma + bn_beta
    return x * jax.nn.sigmoid(y)


if __name__ == "__main__":
    key = jax.random.PRNGKey(0)
    kx, kw_key = jax.random.split(key)

    N, C, H, W = 2, 4, 16, 16
    x = jax.random.normal(kx, (N, C, H, W), dtype=jnp.float32)

    # Conv2d(2, 1, 7, bias=False) weights: deterministic kaiming-uniform-like init.
    fan_in = 2 * K * K
    bound = 1.0 / math.sqrt(fan_in)
    conv_w = jax.random.uniform(kw_key, (1, 2, K, K), jnp.float32, -bound, bound)

    # BatchNorm2d(1) parameters at PyTorch defaults (gamma=1, beta=0, rm=0, rv=1).
    bn_gamma = jnp.ones((), jnp.float32)
    bn_beta = jnp.zeros((), jnp.float32)
    bn_mean = jnp.zeros((), jnp.float32)
    bn_var = jnp.ones((), jnp.float32)

    out = attention_gate(x, conv_w, bn_gamma, bn_beta, bn_mean, bn_var)
    out = jax.block_until_ready(out)

    ref = attention_gate_ref(x, conv_w, bn_gamma, bn_beta, bn_mean, bn_var)
    np.testing.assert_allclose(np.asarray(out), np.asarray(ref), rtol=1e-5, atol=1e-5)

    print("KERNEL_OK")
</pallas_src>

<mosaic_0001>
module attributes {stable_mosaic.version = 11 : i64} {
  func.func @kernel(%arg0: i32, %arg1: memref<1x4x256xf32, #tpu.memory_space<vmem>>, %arg2: memref<2x256x256xf32, #tpu.memory_space<vmem>>, %arg3: memref<1xf32, #tpu.memory_space<smem>>, %arg4: memref<1x4x256xf32, #tpu.memory_space<vmem>>) attributes {dimension_semantics = [#tpu.dimension_semantics<parallel>], iteration_bounds = array<i64: 2>, scalar_prefetch = 0 : i64, scratch_operands = 0 : i64, tpu.core_type = #tpu.core_type<tc>, window_params = [{transform_indices = @transform_0, window_bounds = array<i64: 1, 4, 256>}, {pipeline_mode = #tpu.pipeline_mode<synchronous>, transform_indices = @transform_1, window_bounds = array<i64: 2, 256, 256>}, {transform_indices = @transform_2, window_bounds = array<i64: 1>}, {transform_indices = @transform_3, window_bounds = array<i64: 1, 4, 256>}]} {
    %c0 = arith.constant 0 : index
    %c0_0 = arith.constant 0 : index
    %c0_1 = arith.constant 0 : index
    %0 = vector.load %arg1[%c0, %c0_0, %c0_1] : memref<1x4x256xf32, #tpu.memory_space<vmem>>, vector<1x4x256xf32>
    %cst = arith.constant dense<0xFF800000> : vector<1x256xf32>
    %1 = vector.multi_reduction <maximumf>, %0, %cst [1] : vector<1x4x256xf32> to vector<1x256xf32>
    %cst_2 = arith.constant dense<0.000000e+00> : vector<1x256xf32>
    %2 = vector.multi_reduction <add>, %0, %cst_2 [1] : vector<1x4x256xf32> to vector<1x256xf32>
    %cst_3 = arith.constant 2.500000e-01 : f32
    %3 = vector.broadcast %cst_3 : f32 to vector<1x256xf32>
    %4 = arith.mulf %2, %3 : vector<1x256xf32>
    %c0_4 = arith.constant 0 : index
    %c0_5 = arith.constant 0 : index
    %c0_6 = arith.constant 0 : index
    %5 = vector.load %arg2[%c0_4, %c0_5, %c0_6] : memref<2x256x256xf32, #tpu.memory_space<vmem>>, vector<1x256x256xf32>
    %6 = vector.shape_cast %5 : vector<1x256x256xf32> to vector<256x256xf32>
    %cst_7 = arith.constant dense<0.000000e+00> : vector<1x256xf32>
    %7 = tpu.matmul %1, %6, %cst_7 {dimension_numbers = #tpu.dot_dimension_numbers<[1], [0], [0], [1], [0, 0, 1, 1], [], []>} : vector<1x256xf32>, vector<256x256xf32>, vector<1x256xf32> -> vector<1x256xf32>
    %c1 = arith.constant 1 : index
    %c0_8 = arith.constant 0 : index
    %c0_9 = arith.constant 0 : index
    %8 = vector.load %arg2[%c1, %c0_8, %c0_9] : memref<2x256x256xf32, #tpu.memory_space<vmem>>, vector<1x256x256xf32>
    %9 = vector.shape_cast %8 : vector<1x256x256xf32> to vector<256x256xf32>
    %cst_10 = arith.constant dense<0.000000e+00> : vector<1x256xf32>
    %10 = tpu.matmul %4, %9, %cst_10 {dimension_numbers = #tpu.dot_dimension_numbers<[1], [0], [0], [1], [0, 0, 1, 1], [], []>} : vector<1x256xf32>, vector<256x256xf32>, vector<1x256xf32> -> vector<1x256xf32>
    %11 = arith.addf %7, %10 : vector<1x256xf32>
    %c0_11 = arith.constant 0 : index
    %12 = memref.load %arg3[%c0_11] : memref<1xf32, #tpu.memory_space<smem>>
    %13 = vector.broadcast %12 : f32 to vector<1x256xf32>
    %14 = arith.addf %11, %13 : vector<1x256xf32>
    %cst_12 = arith.constant 5.000000e-01 : f32
    %15 = vector.broadcast %cst_12 : f32 to vector<1x256xf32>
    %16 = arith.mulf %15, %14 : vector<1x256xf32>
    %17 = math.tanh %16 : vector<1x256xf32>
    %cst_13 = arith.constant 5.000000e-01 : f32
    %18 = vector.broadcast %cst_13 : f32 to vector<1x256xf32>
    %19 = arith.mulf %18, %17 : vector<1x256xf32>
    %cst_14 = arith.constant 5.000000e-01 : f32
    %20 = vector.broadcast %cst_14 : f32 to vector<1x256xf32>
    %21 = arith.addf %19, %20 : vector<1x256xf32>
    %22 = vector.shape_cast %21 : vector<1x256xf32> to vector<1x1x256xf32>
    %23 = vector.broadcast %22 : vector<1x1x256xf32> to vector<1x4x256xf32>
    %24 = arith.mulf %0, %23 : vector<1x4x256xf32>
    %c0_15 = arith.constant 0 : index
    %c0_16 = arith.constant 0 : index
    %c0_17 = arith.constant 0 : index
    %25 = vector.load %arg4[%c0_15, %c0_16, %c0_17] : memref<1x4x256xf32, #tpu.memory_space<vmem>>, vector<1x4x256xf32>
    tpu.vector_store %arg4[%c0_15, %c0_16, %c0_17], %24 {strides = array<i32>} : memref<1x4x256xf32, #tpu.memory_space<vmem>>, vector<1x4x256xf32>,
    return
  }
  func.func @transform_0(%arg0: i32) -> (i32, i32, i32) {
    %c0_i32 = arith.constant 0 : i32
    %c0_i32_0 = arith.constant 0 : i32
    %c0_i32_1 = arith.constant 0 : i32
    return %arg0, %c0_i32, %c0_i32_0 : i32, i32, i32
  }
  func.func @transform_1(%arg0: i32) -> (i32, i32, i32) {
    %c0_i32 = arith.constant 0 : i32
    %c0_i32_0 = arith.constant 0 : i32
    %c0_i32_1 = arith.constant 0 : i32
    %c0_i32_2 = arith.constant 0 : i32
    return %c0_i32, %c0_i32_0, %c0_i32_1 : i32, i32, i32
  }
  func.func @transform_2(%arg0: i32) -> i32 {
    %c0_i32 = arith.constant 0 : i32
    %c0_i32_0 = arith.constant 0 : i32
    return %c0_i32 : i32
  }
  func.func @transform_3(%arg0: i32) -> (i32, i32, i32) {
    %c0_i32 = arith.constant 0 : i32
    %c0_i32_0 = arith.constant 0 : i32
    %c0_i32_1 = arith.constant 0 : i32
    return %arg0, %c0_i32, %c0_i32_0 : i32, i32, i32
  }
}

</mosaic_0001>

<llo_original>
// kernel: tpu_custom_call.1
$region0: #{tpu_custom_call.1}
  #allocation0 [shape = 'u32[]', space=smem, size = 0x4, offset = 0x4, fixed_abs, tag = 'smem constant byte address 0x4 - core index']
  #allocation1 [shape = 'u32[72,128]{1,0:T(1,128)}', space=vmem, size = 0x9000, scoped, tag = 'internal scratch']
  #allocation2 [shape = 'f32[1]{0:T(128)S(6)}', space=smem, size = 0x200, scoped, tag = 'scoped memory for tpu_custom_call.1']
  %s0 = inlined_call_operand.hbm [shape: f32[2,4,256], index: 0, kind: input, shape index: {}]
  %s1 = inlined_call_operand.hbm [shape: f32[2,256,256], index: 1, kind: input, shape index: {}]
  %s2 = inlined_call_operand.<no memory space> [shape: f32[1], index: 2, kind: input, shape index: {}]
  %s3 = inlined_call_operand.hbm [shape: f32[2,4,256], index: 3, kind: output, shape index: {}]
  %s4 = sld [smem:[#allocation0]]
  $region53: #{tpu_custom_call.1} parent=0
    _
  %s6 = ssub.s32 1, %s4
  %s7 = scalar_select 0, %s6, %s4
  %8 = sst [smem:[#allocation2]] %s2
  $region1: #{tpu_custom_call.1} parent=0
    #allocation3 [shape = 'u8[8192]{0}', space=vmem, size = 0x2000, scoped, tag = 'input window, operand 0']
    #allocation4 [shape = 's32[2]{0}', space=sflag, size = 0x8, scoped, tag = 'scoped memory for tpu_custom_call.1']
    #allocation5 [shape = 's32[2]{0}', space=sflag, size = 0x8, scoped, tag = 'scoped memory for tpu_custom_call.1']
    #allocation6 [shape = 'u8[524288]{0}', space=vmem, size = 0x80000, scoped, tag = 'input window, operand 1, single buffered']
    #allocation7 [shape = 's32[1]{0}', space=sflag, size = 0x4, scoped, tag = 'scoped memory for tpu_custom_call.1']
    #allocation8 [shape = 'u8[8192]{0}', space=vmem, size = 0x2000, scoped, tag = 'output window, operand 0']
    %9 = vsyncpa [#allocation4], 0
    %s10 = scalar_lea.sflag [#allocation4], 1
    %11 = vsyncpa %s10, 0
    %12 = vsyncpa [#allocation7], 0
    %13 = vsyncpa [#allocation5], 0
    %s14 = scalar_lea.sflag [#allocation5], 1
    %15 = vsyncpa %s14, 0
    loop: start=0, step=1, limit=4
    $region2: #{tpu_custom_call.1} parent=1 // loop_pre_header
      _
    $region3: #{tpu_custom_call.1} parent=1 // loop_header
      %s17 = sphi 0, %s21
      %p18 = scmp.ge.s32.totalorder %s17, 4
      %s27 = sphi 0, %s29
      %s30 = sphi 0, %s27
      %s31 = sphi 0, %s30
      %s47 = sphi 0, %s31
      %s51 = sphi 0, %s51
      %s53 = sphi 0, %s51
      %s54 = sphi 0, %s53
      %s68 = sphi 0, %s54
      %s72 = sphi 0, %s72
      %s74 = sphi 0, %s72
      %s75 = sphi 0, %s74
      %s89 = sphi 0, %s75
      %s95 = sphi 0, %s97
      %s98 = sphi 0, %s95
      %s99 = sphi 0, %s98
      %s115 = sphi 0, %s99
    $region4: #{tpu_custom_call.1} parent=1 // loop_header_branch
      %20 = sbr.rel (%p18) target = $region8
    $region5: #{tpu_custom_call.1} parent=1 // loop_body
      %s22 = ssub.s32 %s17, 1
      %s23 = ssub.s32 %s17, 2
      %s24 = sadd.s32 %s17, 1
      %s25 = ssub.s32 %s17, %s24
      %p26 = scmp.eq.s32.totalorder %s25, 0
      %s28 = sadd.s32 %s27, 1
      %s29 = scalar_select %p26, %s27, %s28
      %p32 = pneg %p26
      %p33 = scmp.eq.s32.totalorder %s17, 1
      %p34 = por %p32, %p33
      %p35 = scmp.ne.s32.totalorder %s27, %s30
      %p36 = scmp.eq.s32.totalorder %s17, 0
      %p37 = por %p35, %p36
      %p38 = scmp.ne.s32.totalorder %s27, %s30
      %p39 = scmp.eq.s32.totalorder %s22, 1
      %p40 = por %p38, %p39
      %p41 = scmp.ne.s32.totalorder %s30, %s31
      %p42 = scmp.eq.s32.totalorder %s22, 0
      %p43 = por %p41, %p42
      %p44 = scmp.ne.s32.totalorder %s30, %s31
      %p45 = scmp.eq.s32.totalorder %s23, 1
      %p46 = por %p44, %p45
      %p48 = scmp.ne.s32.totalorder %s31, %s47
      %p49 = scmp.eq.s32.totalorder %s23, 0
      %p50 = por %p48, %p49
      %s52 = sadd.s32 %s51, 1
      %p55 = scmp.eq.s32.totalorder %s17, 1
      %p56 = scmp.ne.s32.totalorder %s51, %s53
      %p57 = scmp.eq.s32.totalorder %s17, 0
      %p58 = por %p56, %p57
      %p59 = scmp.ne.s32.totalorder %s51, %s53
      %p60 = scmp.eq.s32.totalorder %s22, 1
      %p61 = por %p59, %p60
      %p62 = scmp.ne.s32.totalorder %s53, %s54
      %p63 = scmp.eq.s32.totalorder %s22, 0
      %p64 = por %p62, %p63
      %p65 = scmp.ne.s32.totalorder %s53, %s54
      %p66 = scmp.eq.s32.totalorder %s23, 1
      %p67 = por %p65, %p66
      %p69 = scmp.ne.s32.totalorder %s54, %s68
      %p70 = scmp.eq.s32.totalorder %s23, 0
      %p71 = por %p69, %p70
      %s73 = sadd.s32 %s72, 1
      %p76 = scmp.eq.s32.totalorder %s17, 1
      %p77 = scmp.ne.s32.totalorder %s72, %s74
      %p78 = scmp.eq.s32.totalorder %s17, 0
      %p79 = por %p77, %p78
      %p80 = scmp.ne.s32.totalorder %s72, %s74
      %p81 = scmp.eq.s32.totalorder %s22, 1
      %p82 = por %p80, %p81
      %p83 = scmp.ne.s32.totalorder %s74, %s75
      %p84 = scmp.eq.s32.totalorder %s22, 0
      %p85 = por %p83, %p84
      %p86 = scmp.ne.s32.totalorder %s74, %s75
      %p87 = scmp.eq.s32.totalorder %s23, 1
      %p88 = por %p86, %p87
      %p90 = scmp.ne.s32.totalorder %s75, %s89
      %p91 = scmp.eq.s32.totalorder %s23, 0
      %p92 = por %p90, %p91
      %s93 = ssub.s32 %s17, %s24
      %p94 = scmp.eq.s32.totalorder %s93, 0
      %s96 = sadd.s32 %s95, 1
      %s97 = scalar_select %p94, %s95, %s96
      %p100 = pneg %p94
      %p101 = scmp.eq.s32.totalorder %s17, 1
      %p102 = por %p100, %p101
      %p103 = scmp.ne.s32.totalorder %s95, %s98
      %p104 = scmp.eq.s32.totalorder %s17, 0
      %p105 = por %p103, %p104
      %p106 = scmp.ne.s32.totalorder %s95, %s98
      %p107 = scmp.eq.s32.totalorder %s22, 1
      %p108 = por %p106, %p107
      %p109 = scmp.ne.s32.totalorder %s98, %s99
      %p110 = scmp.eq.s32.totalorder %s22, 0
      %p111 = por %p109, %p110
      %p112 = scmp.ne.s32.totalorder %s98, %s99
      %p113 = scmp.eq.s32.totalorder %s23, 1
      %p114 = por %p112, %p113
      %p116 = scmp.ne.s32.totalorder %s99, %s115
      %p117 = scmp.eq.s32.totalorder %s23, 0
      %p118 = por %p116, %p117
      %p119 = scmp.le.s32.totalorder 1, %s17
      %p120 = scmp.lt.s32.totalorder %s17, 3
      %p121 = pnand %p119, %p120
      %p122 = pneg %p121
      // Predicated region
      $region9: #{tpu_custom_call.1} parent=5 // pred_check
        _
      $region10: #{tpu_custom_call.1} parent=5 // pred_check_branch
        %124 = sbr.rel (%p121) target = $region12
      $region11: #{tpu_custom_call.1} parent=5 // pred_region
        %s125 = ssub.s32 %s17, 1
        // Predicated region
        $region13: #{tpu_custom_call.1} parent=11 // pred_check
          %p126 = pneg %p64
        $region14: #{tpu_custom_call.1} parent=11 // pred_check_branch
          %128 = sbr.rel (%p126) target = $region16
        $region15: #{tpu_custom_call.1} parent=11 // pred_region
          %130 = vsyncadd [#allocation7], 0
          %s131 = sshll.u32 %s1, 4
          %s132 = int_to_ptr.hbm [resolvable:$true] %s131
          %s133 = sshll.u32 [#allocation6], 4
          %s134 = int_to_ptr.vmem [resolvable:$true] %s133
          %139 = dma.hbm_to_vmem [thread:$0]  %s132, 16384, %s134, [#allocation7], 256, 256, 16
        $region16: #{tpu_custom_call.1} parent=11 // pred_fallthru
          _
        // Predicated region
        $region17: #{tpu_custom_call.1} parent=11 // pred_check
          %p140 = pneg %p85
        $region18: #{tpu_custom_call.1} parent=11 // pred_check_branch
          %142 = sbr.rel (%p140) target = $region20
        $region19: #{tpu_custom_call.1} parent=11 // pred_region
          _
        $region20: #{tpu_custom_call.1} parent=11 // pred_fallthru
          _
      $region12: #{tpu_custom_call.1} parent=5 // pred_fallthru
        _
      %p143 = scmp.lt.s32.totalorder %s17, 2
      // Predicated region
      $region21: #{tpu_custom_call.1} parent=5 // pred_check
        %p144 = pneg %p143
      $region22: #{tpu_custom_call.1} parent=5 // pred_check_branch
        %146 = sbr.rel (%p144) target = $region24
      $region23: #{tpu_custom_call.1} parent=5 // pred_region
        // Predicated region
        $region25: #{tpu_custom_call.1} parent=23 // pred_check
          %p147 = pneg %p37
        $region26: #{tpu_custom_call.1} parent=23 // pred_check_branch
          %149 = sbr.rel (%p147) target = $region28
        $region27: #{tpu_custom_call.1} parent=23 // pred_region
          %s150 = sand.u32 %s27, 1
          %s151 = scalar_lea.sflag [#allocation4], %s150
          %s152 = sand.u32 %s27, 1
          %s153 = smul.addr %s152, 8
          %s154 = scalar_lea.vmem [#allocation3], %s153
          %156 = vsyncadd %s151, 0
          %s157 = smul.addr %s17, 2
          %s158 = smul.addr %s157, 4
          %s159 = scalar_lea.hbm %s0, %s158
          %s161 = sshll.u32 %s159, 4
          %s162 = int_to_ptr.hbm [resolvable:$true] %s161
          %s163 = sshll.u32 %s154, 4
          %s164 = int_to_ptr.vmem [resolvable:$true] %s163
          %166 = dma.hbm_to_vmem [thread:$0]  %s162, 128, %s164, %s151
        $region28: #{tpu_custom_call.1} parent=23 // pred_fallthru
          _
      $region24: #{tpu_custom_call.1} parent=5 // pred_fallthru
        _
      %p167 = scmp.le.s32.totalorder 1, %s17
      %p168 = scmp.lt.s32.totalorder %s17, 3
      %p169 = pnand %p167, %p168
      %p170 = pneg %p169
      // Predicated region
      $region29: #{tpu_custom_call.1} parent=5 // pred_check
        _
      $region30: #{tpu_custom_call.1} parent=5 // pred_check_branch
        %172 = sbr.rel (%p169) target = $region32
      $region31: #{tpu_custom_call.1} parent=5 // pred_region
        %s173 = ssub.s32 %s17, 1
        %s174 = sand.u32 %s30, 1
        %s175 = scalar_lea.sflag [#allocation4], %s174
        %s176 = sand.u32 %s30, 1
        %s177 = smul.addr %s176, 8
        %s178 = scalar_lea.vmem [#allocation3], %s177
        // Predicated region
        $region33: #{tpu_custom_call.1} parent=31 // pred_check
          %p179 = pneg %p43
        $region34: #{tpu_custom_call.1} parent=31 // pred_check_branch
          %181 = sbr.rel (%p179) target = $region36
        $region35: #{tpu_custom_call.1} parent=31 // pred_region
          %183 = dma.done %s175, 128
        $region36: #{tpu_custom_call.1} parent=31 // pred_fallthru
          _
        // Predicated region
        $region37: #{tpu_custom_call.1} parent=31 // pred_check
          %p184 = pneg %p64
        $region38: #{tpu_custom_call.1} parent=31 // pred_check_branch
          %186 = sbr.rel (%p184) target = $region40
        $region39: #{tpu_custom_call.1} parent=31 // pred_region
          %188 = dma.done [#allocation7], 16384
        $region40: #{tpu_custom_call.1} parent=31 // pred_fallthru
          _
        %s189 = sand.u32 %s30, 1
        %s190 = scalar_lea.sflag [#allocation4], %s189
        %s191 = sand.u32 %s30, 1
        %s192 = smul.addr %s191, 8
        %s193 = scalar_lea.vmem [#allocation3], %s192
        %p194 = pneg %p43
        %p195 = pneg %p40
        %p196 = pneg %p64
        %p197 = pneg %p61
        %p198 = pneg %p85
        %p199 = pneg %p82
        %p200 = pneg %p111
        %p201 = pneg %p108
        %s202 = sand.u32 %s98, 1
        %s203 = scalar_lea.sflag [#allocation5], %s202
        %s204 = sand.u32 %s98, 1
        %s205 = smul.addr %s204, 8
        %s206 = scalar_lea.vmem [#allocation8], %s205
        %v207 = vld [vmem:[%s178] sm:$0xff]
        %209 = vst [vmem:[#allocation1] ss:$2 sm:$0xff] %v207
        %v210 = vld.sshfl [vmem:[#allocation1] sm:$0xff pattern:$0x75316420]
        %v211 = vld.sshfl [vmem:[#allocation1 + $0x8] sm:$0xff pattern:$0x75316420]
        %vm214 = vcmask 1043456
        %v215 = vsel %vm214, %v210, -inf
        %v216 = vrot.slane %v215, 4
        %v217 = vmax.f32 %v215, %v216
        %v218 = vrot.slane %v217, 2
        %v219 = vmax.f32 %v217, %v218
        %v220 = vrot.slane %v219, 1
        %v221 = vmax.f32 %v219, %v220
        %v222 = vsel %vm214, %v211, -inf
        %v223 = vrot.slane %v222, 4
        %v224 = vmax.f32 %v222, %v223
        %v225 = vrot.slane %v224, 2
        %v226 = vmax.f32 %v224, %v225
        %v227 = vrot.slane %v226, 1
        %v228 = vmax.f32 %v226, %v227
        %229 = vst [vmem:[#allocation1] ss:$2 sm:$0xff] %v207
        %v230 = vld.sshfl [vmem:[#allocation1] sm:$0xff pattern:$0x75316420]
        %v231 = vld.sshfl [vmem:[#allocation1 + $0x8] sm:$0xff pattern:$0x75316420]
        %v234 = vsel %vm214, %v230, 0.0
        %v235 = vrot.slane %v234, 4
        %v236 = vadd.f32 %v234, %v235
        %v237 = vrot.slane %v236, 2
        %v238 = vadd.f32 %v236, %v237
        %v239 = vrot.slane %v238, 1
        %v240 = vadd.f32 %v238, %v239
        %v241 = vsel %vm214, %v231, 0.0
        %v242 = vrot.slane %v241, 4
        %v243 = vadd.f32 %v241, %v242
        %v244 = vrot.slane %v243, 2
        %v245 = vadd.f32 %v243, %v244
        %v246 = vrot.slane %v245, 1
        %v247 = vadd.f32 %v245, %v246
        %v248 = vmul.f32 %v240, 0.25
        %v249 = vmul.f32 %v247, 0.25
        %v250 = vld [vmem:[#allocation6] sm:$0xff]
        %v251 = vld [vmem:[#allocation6 + $0x8] sm:$0xff]
        %v252 = vld [vmem:[#allocation6 + $0x10] sm:$0xff]
        %v253 = vld [vmem:[#allocation6 + $0x18] sm:$0xff]
        %v254 = vld [vmem:[#allocation6 + $0x20] sm:$0xff]
        %v255 = vld [vmem:[#allocation6 + $0x28] sm:$0xff]
        %v256 = vld [vmem:[#allocation6 + $0x30] sm:$0xff]
        %v257 = vld [vmem:[#allocation6 + $0x38] sm:$0xff]
        %v258 = vld [vmem:[#allocation6 + $0x40] sm:$0xff]
        %v259 = vld [vmem:[#allocation6 + $0x48] sm:$0xff]
        %v260 = vld [vmem:[#allocation6 + $0x50] sm:$0xff]
        %v261 = vld [vmem:[#allocation6 + $0x58] sm:$0xff]
        %v262 = vld [vmem:[#allocation6 + $0x60] sm:$0xff]
        %v263 = vld [vmem:[#allocation6 + $0x68] sm:$0xff]
        %v264 = vld [vmem:[#allocation6 + $0x70] sm:$0xff]
        %v265 = vld [vmem:[#allocation6 + $0x78] sm:$0xff]
        %v266 = vld [vmem:[#allocation6 + $0x80] sm:$0xff]
        %v267 = vld [vmem:[#allocation6 + $0x88] sm:$0xff]
        %v268 = vld [vmem:[#allocation6 + $0x90] sm:$0xff]
        %v269 = vld [vmem:[#allocation6 + $0x98] sm:$0xff]
        %v270 = vld [vmem:[#allocation6 + $0xa0] sm:$0xff]
        %v271 = vld [vmem:[#allocation6 + $0xa8] sm:$0xff]
        %v272 = vld [vmem:[#allocation6 + $0xb0] sm:$0xff]
        %v273 = vld [vmem:[#allocation6 + $0xb8] sm:$0xff]
        %v274 = vld [vmem:[#allocation6 + $0xc0] sm:$0xff]
        %v275 = vld [vmem:[#allocation6 + $0xc8] sm:$0xff]
        %v276 = vld [vmem:[#allocation6 + $0xd0] sm:$0xff]
        %v277 = vld [vmem:[#allocation6 + $0xd8] sm:$0xff]
        %v278 = vld [vmem:[#allocation6 + $0xe0] sm:$0xff]
        %v279 = vld [vmem:[#allocation6 + $0xe8] sm:$0xff]
        %v280 = vld [vmem:[#allocation6 + $0xf0] sm:$0xff]
        %v281 = vld [vmem:[#allocation6 + $0xf8] sm:$0xff]
        %v282 = vld [vmem:[#allocation6 + $0x100] sm:$0xff]
        %v283 = vld [vmem:[#allocation6 + $0x108] sm:$0xff]
        %v284 = vld [vmem:[#allocation6 + $0x110] sm:$0xff]
        %v285 = vld [vmem:[#allocation6 + $0x118] sm:$0xff]
        %v286 = vld [vmem:[#allocation6 + $0x120] sm:$0xff]
        %v287 = vld [vmem:[#allocation6 + $0x128] sm:$0xff]
        %v288 = vld [vmem:[#allocation6 + $0x130] sm:$0xff]
        %v289 = vld [vmem:[#allocation6 + $0x138] sm:$0xff]
        %v290 = vld [vmem:[#allocation6 + $0x140] sm:$0xff]
        %v291 = vld [vmem:[#allocation6 + $0x148] sm:$0xff]
        %v292 = vld [vmem:[#allocation6 + $0x150] sm:$0xff]
        %v293 = vld [vmem:[#allocation6 + $0x158] sm:$0xff]
        %v294 = vld [vmem:[#allocation6 + $0x160] sm:$0xff]
        %v295 = vld [vmem:[#allocation6 + $0x168] sm:$0xff]
        %v296 = vld [vmem:[#allocation6 + $0x170] sm:$0xff]
        %v297 = vld [vmem:[#allocation6 + $0x178] sm:$0xff]
        %v298 = vld [vmem:[#allocation6 + $0x180] sm:$0xff]
        %v299 = vld [vmem:[#allocation6 + $0x188] sm:$0xff]
        %v300 = vld [vmem:[#allocation6 + $0x190] sm:$0xff]
        %v301 = vld [vmem:[#allocation6 + $0x198] sm:$0xff]
        %v302 = vld [vmem:[#allocation6 + $0x1a0] sm:$0xff]
        %v303 = vld [vmem:[#allocation6 + $0x1a8] sm:$0xff]
        %v304 = vld [vmem:[#allocation6 + $0x1b0] sm:$0xff]
        %v305 = vld [vmem:[#allocation6 + $0x1b8] sm:$0xff]
        %v306 = vld [vmem:[#allocation6 + $0x1c0] sm:$0xff]
        %v307 = vld [vmem:[#allocation6 + $0x1c8] sm:$0xff]
        %v308 = vld [vmem:[#allocation6 + $0x1d0] sm:$0xff]
        %v309 = vld [vmem:[#allocation6 + $0x1d8] sm:$0xff]
        %v310 = vld [vmem:[#allocation6 + $0x1e0] sm:$0xff]
        %v311 = vld [vmem:[#allocation6 + $0x1e8] sm:$0xff]
        %v312 = vld [vmem:[#allocation6 + $0x1f0] sm:$0xff]
        %v313 = vld [vmem:[#allocation6 + $0x1f8] sm:$0xff]
        %s314 = scalar_lea.vmem [#allocation6], 512
        %v315 = vld [vmem:[%s314] sm:$0xff]
        %v316 = vld [vmem:[%s314 + $0x8] sm:$0xff]
        %v317 = vld [vmem:[%s314 + $0x10] sm:$0xff]
        %v318 = vld [vmem:[%s314 + $0x18] sm:$0xff]
        %v319 = vld [vmem:[%s314 + $0x20] sm:$0xff]
        %v320 = vld [vmem:[%s314 + $0x28] sm:$0xff]
        %v321 = vld [vmem:[%s314 + $0x30] sm:$0xff]
        %v322 = vld [vmem:[%s314 + $0x38] sm:$0xff]
        %v323 = vld [vmem:[%s314 + $0x40] sm:$0xff]
        %v324 = vld [vmem:[%s314 + $0x48] sm:$0xff]
        %v325 = vld [vmem:[%s314 + $0x50] sm:$0xff]
        %v326 = vld [vmem:[%s314 + $0x58] sm:$0xff]
        %v327 = vld [vmem:[%s314 + $0x60] sm:$0xff]
        %v328 = vld [vmem:[%s314 + $0x68] sm:$0xff]
        %v329 = vld [vmem:[%s314 + $0x70] sm:$0xff]
        %v330 = vld [vmem:[%s314 + $0x78] sm:$0xff]
        %v331 = vld [vmem:[%s314 + $0x80] sm:$0xff]
        %v332 = vld [vmem:[%s314 + $0x88] sm:$0xff]
        %v333 = vld [vmem:[%s314 + $0x90] sm:$0xff]
        %v334 = vld [vmem:[%s314 + $0x98] sm:$0xff]
        %v335 = vld [vmem:[%s314 + $0xa0] sm:$0xff]
        %v336 = vld [vmem:[%s314 + $0xa8] sm:$0xff]
        %v337 = vld [vmem:[%s314 + $0xb0] sm:$0xff]
        %v338 = vld [vmem:[%s314 + $0xb8] sm:$0xff]
        %v339 = vld [vmem:[%s314 + $0xc0] sm:$0xff]
        %v340 = vld [vmem:[%s314 + $0xc8] sm:$0xff]
        %v341 = vld [vmem:[%s314 + $0xd0] sm:$0xff]
        %v342 = vld [vmem:[%s314 + $0xd8] sm:$0xff]
        %v343 = vld [vmem:[%s314 + $0xe0] sm:$0xff]
        %v344 = vld [vmem:[%s314 + $0xe8] sm:$0xff]
        %v345 = vld [vmem:[%s314 + $0xf0] sm:$0xff]
        %v346 = vld [vmem:[%s314 + $0xf8] sm:$0xff]
        %v347 = vld [vmem:[%s314 + $0x100] sm:$0xff]
        %v348 = vld [vmem:[%s314 + $0x108] sm:$0xff]
        %v349 = vld [vmem:[%s314 + $0x110] sm:$0xff]
        %v350 = vld [vmem:[%s314 + $0x118] sm:$0xff]
        %v351 = vld [vmem:[%s314 + $0x120] sm:$0xff]
        %v352 = vld [vmem:[%s314 + $0x128] sm:$0xff]
        %v353 = vld [vmem:[%s314 + $0x130] sm:$0xff]
        %v354 = vld [vmem:[%s314 + $0x138] sm:$0xff]
        %v355 = vld [vmem:[%s314 + $0x140] sm:$0xff]
        %v356 = vld [vmem:[%s314 + $0x148] sm:$0xff]
        %v357 = vld [vmem:[%s314 + $0x150] sm:$0xff]
        %v358 = vld [vmem:[%s314 + $0x158] sm:$0xff]
        %v359 = vld [vmem:[%s314 + $0x160] sm:$0xff]
        %v360 = vld [vmem:[%s314 + $0x168] sm:$0xff]
        %v361 = vld [vmem:[%s314 + $0x170] sm:$0xff]
        %v362 = vld [vmem:[%s314 + $0x178] sm:$0xff]
        %v363 = vld [vmem:[%s314 + $0x180] sm:$0xff]
        %v364 = vld [vmem:[%s314 + $0x188] sm:$0xff]
        %v365 = vld [vmem:[%s314 + $0x190] sm:$0xff]
        %v366 = vld [vmem:[%s314 + $0x198] sm:$0xff]
        %v367 = vld [vmem:[%s314 + $0x1a0] sm:$0xff]
        %v368 = vld [vmem:[%s314 + $0x1a8] sm:$0xff]
        %v369 = vld [vmem:[%s314 + $0x1b0] sm:$0xff]
        %v370 = vld [vmem:[%s314 + $0x1b8] sm:$0xff]
        %v371 = vld [vmem:[%s314 + $0x1c0] sm:$0xff]
        %v372 = vld [vmem:[%s314 + $0x1c8] sm:$0xff]
        %v373 = vld [vmem:[%s314 + $0x1d0] sm:$0xff]
        %v374 = vld [vmem:[%s314 + $0x1d8] sm:$0xff]
        %v375 = vld [vmem:[%s314 + $0x1e0] sm:$0xff]
        %v376 = vld [vmem:[%s314 + $0x1e8] sm:$0xff]
        %v377 = vld [vmem:[%s314 + $0x1f0] sm:$0xff]
        %v378 = vld [vmem:[%s314 + $0x1f8] sm:$0xff]
        %379 = vmatpush.msra.mxu0 %v345
        %380 = vmatpush.msra.mxu0 %v343
        %381 = vmatpush.msra.mxu0 %v341
        %382 = vmatpush.msra.mxu0 %v339
        %383 = vmatpush.msra.mxu0 %v337
        %384 = vmatpush.msra.mxu0 %v335
        %385 = vmatpush.msra.mxu0 %v333
        %386 = vmatpush.msra.mxu0 %v331
        %387 = vmatpush.msra.mxu0 %v329
        %388 = vmatpush.msra.mxu0 %v327
        %389 = vmatpush.msra.mxu0 %v325
        %390 = vmatpush.msra.mxu0 %v323
        %391 = vmatpush.msra.mxu0 %v321
        %392 = vmatpush.msra.mxu0 %v319
        %393 = vmatpush.msra.mxu0 %v317
        %394 = vmatpush.msra.mxu0 %v315
        %395 = vmatmul.f32.gmra.mxu0 %v248
        %v396 = vpop.f32.mrf.mxu0
        %v397 = vadd.f32 0.0, %v396
        %398 = vdwg.mxu0
        %399 = vmatpush.msra.mxu0 %v377
        %400 = vmatpush.msra.mxu0 %v375
        %401 = vmatpush.msra.mxu0 %v373
        %402 = vmatpush.msra.mxu0 %v371
        %403 = vmatpush.msra.mxu0 %v369
        %404 = vmatpush.msra.mxu0 %v367
        %405 = vmatpush.msra.mxu0 %v365
        %406 = vmatpush.msra.mxu0 %v363
        %407 = vmatpush.msra.mxu0 %v361
        %408 = vmatpush.msra.mxu0 %v359
        %409 = vmatpush.msra.mxu0 %v357
        %410 = vmatpush.msra.mxu0 %v355
        %411 = vmatpush.msra.mxu0 %v353
        %412 = vmatpush.msra.mxu0 %v351
        %413 = vmatpush.msra.mxu0 %v349
        %414 = vmatpush.msra.mxu0 %v347
        %415 = vmatmul.f32.gmra.mxu0 %v249
        %v416 = vpop.f32.mrf.mxu0
        %v417 = vadd.f32 %v397, %v416
        %418 = vdwg.mxu0
        %419 = vmatpush.msra.mxu0 %v346
        %420 = vmatpush.msra.mxu0 %v344
        %421 = vmatpush.msra.mxu0 %v342
        %422 = vmatpush.msra.mxu0 %v340
        %423 = vmatpush.msra.mxu0 %v338
        %424 = vmatpush.msra.mxu0 %v336
        %425 = vmatpush.msra.mxu0 %v334
        %426 = vmatpush.msra.mxu0 %v332
        %427 = vmatpush.msra.mxu0 %v330
        %428 = vmatpush.msra.mxu0 %v328
        %429 = vmatpush.msra.mxu0 %v326
        %430 = vmatpush.msra.mxu0 %v324
        %431 = vmatpush.msra.mxu0 %v322
        %432 = vmatpush.msra.mxu0 %v320
        %433 = vmatpush.msra.mxu0 %v318
        %434 = vmatpush.msra.mxu0 %v316
        %435 = vmatmul.f32.gmra.mxu0 %v248
        %v436 = vpop.f32.mrf.mxu0
        %v437 = vadd.f32 0.0, %v436
        %438 = vdwg.mxu0
        %439 = vmatpush.msra.mxu0 %v378
        %440 = vmatpush.msra.mxu0 %v376
        %441 = vmatpush.msra.mxu0 %v374
        %442 = vmatpush.msra.mxu0 %v372
        %443 = vmatpush.msra.mxu0 %v370
        %444 = vmatpush.msra.mxu0 %v368
        %445 = vmatpush.msra.mxu0 %v366
        %446 = vmatpush.msra.mxu0 %v364
        %447 = vmatpush.msra.mxu0 %v362
        %448 = vmatpush.msra.mxu0 %v360
        %449 = vmatpush.msra.mxu0 %v358
        %450 = vmatpush.msra.mxu0 %v356
        %451 = vmatpush.msra.mxu0 %v354
        %452 = vmatpush.msra.mxu0 %v352
        %453 = vmatpush.msra.mxu0 %v350
        %454 = vmatpush.msra.mxu0 %v348
        %455 = vmatmul.f32.gmra.mxu0 %v249
        %v456 = vpop.f32.mrf.mxu0
        %v457 = vadd.f32 %v437, %v456
        %458 = vdwg.mxu0
        %459 = vmatpush.msra.mxu0 %v280
        %460 = vmatpush.msra.mxu0 %v278
        %461 = vmatpush.msra.mxu0 %v276
        %462 = vmatpush.msra.mxu0 %v274
        %463 = vmatpush.msra.mxu0 %v272
        %464 = vmatpush.msra.mxu0 %v270
        %465 = vmatpush.msra.mxu0 %v268
        %466 = vmatpush.msra.mxu0 %v266
        %467 = vmatpush.msra.mxu0 %v264
        %468 = vmatpush.msra.mxu0 %v262
        %469 = vmatpush.msra.mxu0 %v260
        %470 = vmatpush.msra.mxu0 %v258
        %471 = vmatpush.msra.mxu0 %v256
        %472 = vmatpush.msra.mxu0 %v254
        %473 = vmatpush.msra.mxu0 %v252
        %474 = vmatpush.msra.mxu0 %v250
        %475 = vmatmul.f32.gmra.mxu0 %v221
        %v476 = vpop.f32.mrf.mxu0
        %v477 = vadd.f32 %v417, %v476
        %478 = vdwg.mxu0
        %479 = vmatpush.msra.mxu0 %v312
        %480 = vmatpush.msra.mxu0 %v310
        %481 = vmatpush.msra.mxu0 %v308
        %482 = vmatpush.msra.mxu0 %v306
        %483 = vmatpush.msra.mxu0 %v304
        %484 = vmatpush.msra.mxu0 %v302
        %485 = vmatpush.msra.mxu0 %v300
        %486 = vmatpush.msra.mxu0 %v298
        %487 = vmatpush.msra.mxu0 %v296
        %488 = vmatpush.msra.mxu0 %v294
        %489 = vmatpush.msra.mxu0 %v292
        %490 = vmatpush.msra.mxu0 %v290
        %491 = vmatpush.msra.mxu0 %v288
        %492 = vmatpush.msra.mxu0 %v286
        %493 = vmatpush.msra.mxu0 %v284
        %494 = vmatpush.msra.mxu0 %v282
        %495 = vmatmul.f32.gmra.mxu0 %v228
        %v496 = vpop.f32.mrf.mxu0
        %v497 = vadd.f32 %v477, %v496
        %498 = vdwg.mxu0
        %499 = vmatpush.msra.mxu0 %v281
        %500 = vmatpush.msra.mxu0 %v279
        %501 = vmatpush.msra.mxu0 %v277
        %502 = vmatpush.msra.mxu0 %v275
        %503 = vmatpush.msra.mxu0 %v273
        %504 = vmatpush.msra.mxu0 %v271
        %505 = vmatpush.msra.mxu0 %v269
        %506 = vmatpush.msra.mxu0 %v267
        %507 = vmatpush.msra.mxu0 %v265
        %508 = vmatpush.msra.mxu0 %v263
        %509 = vmatpush.msra.mxu0 %v261
        %510 = vmatpush.msra.mxu0 %v259
        %511 = vmatpush.msra.mxu0 %v257
        %512 = vmatpush.msra.mxu0 %v255
        %513 = vmatpush.msra.mxu0 %v253
        %514 = vmatpush.msra.mxu0 %v251
        %515 = vmatmul.f32.gmra.mxu0 %v221
        %v516 = vpop.f32.mrf.mxu0
        %v517 = vadd.f32 %v457, %v516
        %518 = vdwg.mxu0
        %519 = vmatpush.msra.mxu0 %v313
        %520 = vmatpush.msra.mxu0 %v311
        %521 = vmatpush.msra.mxu0 %v309
        %522 = vmatpush.msra.mxu0 %v307
        %523 = vmatpush.msra.mxu0 %v305
        %524 = vmatpush.msra.mxu0 %v303
        %525 = vmatpush.msra.mxu0 %v301
        %526 = vmatpush.msra.mxu0 %v299
        %527 = vmatpush.msra.mxu0 %v297
        %528 = vmatpush.msra.mxu0 %v295
        %529 = vmatpush.msra.mxu0 %v293
        %530 = vmatpush.msra.mxu0 %v291
        %531 = vmatpush.msra.mxu0 %v289
        %532 = vmatpush.msra.mxu0 %v287
        %533 = vmatpush.msra.mxu0 %v285
        %534 = vmatpush.msra.mxu0 %v283
        %535 = vmatmul.f32.gmra.mxu0 %v228
        %v536 = vpop.f32.mrf.mxu0
        %v537 = vadd.f32 %v517, %v536
        %538 = vdwg.mxu0
        %s539 = sld [smem:[#allocation2]]
        %v540 = vstv %s539
        %v541 = vadd.f32 %v497, %v540
        %v542 = vadd.f32 %v537, %v540
        %v543 = vmul.f32 %v541, 0.5
        %v544 = vmul.f32 %v542, 0.5
        %v545 = vtanh.pop %v543
        %v546 = vtanh.pop %v544
        %v547 = vmul.f32 %v545, 0.5
        %v548 = vmul.f32 %v546, 0.5
        %v549 = vadd.f32 %v547, 0.5
        %v550 = vadd.f32 %v548, 0.5
        %v551 = vperm.slane %v549, 0
        %v552 = vperm.slane %v550, 0
        %v555 = vrot.slane %v552, 4
        %v556 = vsel %vm214, %v551, %v555
        %v558 = vmul.f32 %v207, %v556
        %559 = vst [vmem:[%s206] sm:$0xff] %v558
        %s560 = sand.u32 %s98, 1
        %s561 = scalar_lea.sflag [#allocation5], %s560
        %s562 = sand.u32 %s98, 1
        %s563 = smul.addr %s562, 8
        %s564 = scalar_lea.vmem [#allocation8], %s563
        // Predicated region
        $region41: #{tpu_custom_call.1} parent=31 // pred_check
          %p565 = pneg %p108
        $region42: #{tpu_custom_call.1} parent=31 // pred_check_branch
          %567 = sbr.rel (%p565) target = $region44
        $region43: #{tpu_custom_call.1} parent=31 // pred_region
          %569 = vsyncadd %s561, 0
          %s570 = smul.addr %s22, 2
          %s571 = smul.addr %s570, 4
          %s572 = scalar_lea.hbm %s3, %s571
          %s574 = sshll.u32 %s564, 4
          %s575 = int_to_ptr.vmem [resolvable:$true] %s574
          %s576 = sshll.u32 %s572, 4
          %s577 = int_to_ptr.hbm [resolvable:$true] %s576
          %579 = dma.vmem_to_hbm [thread:$0]  %s575, 128, %s577, %s561
        $region44: #{tpu_custom_call.1} parent=31 // pred_fallthru
          _
      $region32: #{tpu_custom_call.1} parent=5 // pred_fallthru
        _
      %p580 = scmp.le.s32.totalorder 2, %s17
      // Predicated region
      $region45: #{tpu_custom_call.1} parent=5 // pred_check
        %p581 = pneg %p580
      $region46: #{tpu_custom_call.1} parent=5 // pred_check_branch
        %583 = sbr.rel (%p581) target = $region48
      $region47: #{tpu_custom_call.1} parent=5 // pred_region
        %s584 = ssub.s32 %s17, 2
        // Predicated region
        $region49: #{tpu_custom_call.1} parent=47 // pred_check
          %p585 = pneg %p114
        $region50: #{tpu_custom_call.1} parent=47 // pred_check_branch
          %587 = sbr.rel (%p585) target = $region52
        $region51: #{tpu_custom_call.1} parent=47 // pred_region
          %s588 = sand.u32 %s99, 1
          %s589 = scalar_lea.sflag [#allocation5], %s588
          %s590 = sand.u32 %s99, 1
          %s591 = smul.addr %s590, 8
          %s592 = scalar_lea.vmem [#allocation8], %s591
          %594 = dma.done %s589, 128
        $region52: #{tpu_custom_call.1} parent=47 // pred_fallthru
          _
      $region48: #{tpu_custom_call.1} parent=5 // pred_fallthru
        _
    $region6: #{tpu_custom_call.1} parent=1 // loop_footer
      %s21 = sadd.s32 1, %s17
    $region7: #{tpu_custom_call.1} parent=1 // loop_footer_branch
      %16 = sbr.rel target = $region3
    $region8: #{tpu_custom_call.1} parent=1 // loop_exit
      _
    %595 = vsyncpa [#allocation4], 1
    %s596 = scalar_lea.sflag [#allocation4], 1
    %597 = vsyncpa %s596, 1
    %598 = vsyncpa [#allocation7], 1
    %599 = vsyncpa [#allocation5], 1
    %s600 = scalar_lea.sflag [#allocation5], 1
    %601 = vsyncpa %s600, 1

</llo_original>
